<compile_context>
chip_gen: v7x
topology: tpu7x:2x2x1
jax: 0.10.0
libtpu: 0.0.40
codegen_flags: <defaults>
</compile_context>

<pallas_src>
import functools

import jax
import jax.numpy as jnp
from jax.experimental import pallas as pl
from jax.experimental.pallas import tpu as pltpu

IN_F, HID1, HID2, HID3, OUT_F = 24, 32, 16, 12, 7
BN_EPS = 1e-5
LANE = 256  # batch-chunk alignment (256-wide MXU on v6e/v7x; multiple of 128 for v5e)


def contempt_kernel(slopes_ref, x_ref, w12_ref, b12_ref, w3_ref, b3_ref,
                    w4_ref, b4_ref, o_ref):
    """All tensors are (features, batch_tile); weights are (out_f, in_f)."""
    cd = w12_ref.dtype                       # MXU operand dtype (bf16 or f32)
    a2 = slopes_ref[0, 0]                    # PReLU slope (prelu2)
    a3 = slopes_ref[0, 1]                    # PReLU slope (prelu3)

    # fused fc1+fc2 (exact; see header) -> dropout(identity) -> PReLU(a2)
    h2 = jnp.dot(w12_ref[...], x_ref[...],
                 preferred_element_type=jnp.float32) + b12_ref[...]      # (16, TB)
    h2a = jnp.where(h2 > 0, h2, a2 * h2)

    # fc3 with eval-mode BatchNorm folded in -> PReLU(a3)
    h3 = jnp.dot(w3_ref[...], h2a.astype(cd),
                 preferred_element_type=jnp.float32) + b3_ref[...]       # (12, TB)
    h3a = jnp.where(h3 > 0, h3, a3 * h3)

    # out -> sigmoid (lane-dense EUP work, full-width store)
    logits = jnp.dot(w4_ref[...], h3a.astype(cd),
                     preferred_element_type=jnp.float32) + b4_ref[...]   # (7, TB)
    o_ref[...] = jax.nn.sigmoid(logits)


def _round_up(n, m):
    return ((n + m - 1) // m) * m


def _pick_tile(B, tile_b):
    """Lane-aligned batch tile; >=2 grid steps when possible (v7x megacore)."""
    if B <= LANE:
        return B                              # single block; lane dim == full array dim
    tb = _round_up(min(tile_b, 32768), LANE)
    half = _round_up(pl.cdiv(B, 2), LANE)     # force at least 2 grid steps
    return max(LANE, min(tb, half))


def contempt_net_forward(x, params, *, tile_b=8192, compute_dtype=jnp.bfloat16):
    """x: (B, ...) with prod(...) == 24.  Returns (B, 7) float32 probabilities."""
    B = x.shape[0]
    x2d = x.reshape(B, -1)
    assert x2d.shape[1] == IN_F, "ContemptNet expects 24 input features"

    cd = compute_dtype
    cd_bytes = jnp.dtype(cd).itemsize

    # ---- offline parameter folding (exact affine composition, f32) -----------
    w12 = params["w1"] @ params["w2"]                                  # (24, 16)
    b12 = params["b1"] @ params["w2"] + params["b2"]                   # (1, 16)
    bn_scale = params["bn_gamma"] * jax.lax.rsqrt(params["bn_var"] + BN_EPS)
    w3f = params["w3"] * bn_scale                                      # (16, 12)
    b3f = (params["b3"] - params["bn_mean"]) * bn_scale + params["bn_beta"]

    # transposed (out_f, in_f) weights / (out_f, 1) biases for lane-dense layout
    w12t = w12.T.astype(cd)                    # (16, 24)
    w3t = w3f.T.astype(cd)                     # (12, 16)
    w4t = params["w4"].T.astype(cd)            # (7, 12)
    b12t = b12.T.astype(jnp.float32)           # (16, 1)
    b3t = b3f.T.astype(jnp.float32)            # (12, 1)
    b4t = params["b4"].T.astype(jnp.float32)   # (7, 1)

    slopes = jnp.concatenate(
        [params["a2"].reshape(1, 1), params["a3"].reshape(1, 1)], axis=1
    ).astype(jnp.float32)                      # (1, 2) SMEM scalars

    # Lane-dense input (24, B): XLA fuses this transpose with the dtype cast
    # (single pass over x). No host-side pad; ragged tail blocks are masked.
    x_t = x2d.astype(cd).T                     # (24, B)

    TB = _pick_tile(B, tile_b)
    grid = (pl.cdiv(B, TB),)

    # explicit VMEM budget: double-buffered x/out + f32 intermediates; cap keeps
    # us comfortably under v7x's 64 MiB physical VMEM, floor keeps v5e defaults.
    vmem_need = (2 * IN_F * TB * cd_bytes        # x double buffer
                 + 2 * 8 * TB * 4                # out double buffer (7 -> 8 sublanes)
                 + 8 * HID2 * TB * 4             # intermediate headroom
                 + (1 << 20))                    # weights / biases / misc
    vmem_limit = int(min(max(vmem_need, 16 << 20), 40 << 20))

    cost = pl.CostEstimate(
        flops=2 * B * (IN_F * HID2 + HID2 * HID3 + HID3 * OUT_F),
        transcendentals=B * OUT_F,
        bytes_accessed=B * (IN_F * cd_bytes + OUT_F * 4)
        + (HID2 * IN_F + HID3 * HID2 + OUT_F * HID3) * cd_bytes,
    )

    full = lambda i: (0, 0)   # weights / biases: single VMEM-resident block
    out_t = pl.pallas_call(
        contempt_kernel,
        out_shape=jax.ShapeDtypeStruct((OUT_F, B), jnp.float32),
        grid=grid,
        in_specs=[
            pl.BlockSpec((1, 2), full, memory_space=pltpu.MemorySpace.SMEM),  # slopes
            pl.BlockSpec((IN_F, TB), lambda i: (0, i)),                       # x tile
            pl.BlockSpec((HID2, IN_F), full),                                 # w12^T
            pl.BlockSpec((HID2, 1), full),                                    # b12^T
            pl.BlockSpec((HID3, HID2), full),                                 # w3'^T
            pl.BlockSpec((HID3, 1), full),                                    # b3'^T
            pl.BlockSpec((OUT_F, HID3), full),                                # w4^T
            pl.BlockSpec((OUT_F, 1), full),                                   # b4^T
        ],
        out_specs=pl.BlockSpec((OUT_F, TB), lambda i: (0, i)),
        compiler_params=pltpu.CompilerParams(
            dimension_semantics=("parallel",),
            vmem_limit_bytes=vmem_limit),
        cost_estimate=cost,
    )(slopes, x_t, w12t, b12t, w3t, b3t, w4t, b4t)

    # Consumers that can take the lane-dense (7, B) layout should use out_t directly.
    return out_t.T                             # (B, 7) float32, matches the torch module


def init_params(key):
    """Deterministic parameter init matching the torch module's shapes.

    Linear weights are stored pre-transposed: (in_features, out_features).
    """
    ks = jax.random.split(key, 8)

    def linear(kw, kb, fan_in, fan_out):
        bound = 1.0 / jnp.sqrt(fan_in)
        w = jax.random.uniform(kw, (fan_in, fan_out), jnp.float32, -bound, bound)
        b = jax.random.uniform(kb, (1, fan_out), jnp.float32, -bound, bound)
        return w, b

    w1, b1 = linear(ks[0], ks[1], IN_F, HID1)
    w2, b2 = linear(ks[2], ks[3], HID1, HID2)
    w3, b3 = linear(ks[4], ks[5], HID2, HID3)
    w4, b4 = linear(ks[6], ks[7], HID3, OUT_F)

    return dict(
        w1=w1, b1=b1,
        w2=w2, b2=b2,
        a2=jnp.full((1, 1), 0.25, jnp.float32),   # PReLU init = 0.25
        w3=w3, b3=b3,
        bn_gamma=jnp.ones((1, HID3), jnp.float32),
        bn_beta=jnp.zeros((1, HID3), jnp.float32),
        bn_mean=jnp.zeros((1, HID3), jnp.float32),
        bn_var=jnp.ones((1, HID3), jnp.float32),
        a3=jnp.full((1, 1), 0.25, jnp.float32),
        w4=w4, b4=b4,
    )


def reference_forward(x, p):
    """Pure-JAX reference mirroring the torch forward (eval mode), unfolded."""
    x = x.reshape(x.shape[0], -1).astype(jnp.float32)
    h1 = x @ p["w1"] + p["b1"]
    h2 = h1 @ p["w2"] + p["b2"]                       # note: pre-activation h1
    h2a = jnp.where(h2 > 0, h2, p["a2"][0, 0] * h2)
    h3 = h2a @ p["w3"] + p["b3"]
    bn = (h3 - p["bn_mean"]) * jax.lax.rsqrt(p["bn_var"] + BN_EPS) \
        * p["bn_gamma"] + p["bn_beta"]
    h3a = jnp.where(bn > 0, bn, p["a3"][0, 0] * bn)
    return jax.nn.sigmoid(h3a @ p["w4"] + p["b4"])


if __name__ == "__main__":
    key = jax.random.PRNGKey(0)
    kx, kx2, kx3, kp = jax.random.split(key, 4)
    params = init_params(kp)

    fwd_f32 = jax.jit(functools.partial(contempt_net_forward,
                                        compute_dtype=jnp.float32))
    fwd_bf16 = jax.jit(functools.partial(contempt_net_forward,
                                         compute_dtype=jnp.bfloat16))

    # Tiny batch, f32 MXU operands, tight tolerance (single full-array block).
    B = 8
    x = jax.random.normal(kx, (B, IN_F), jnp.float32)
    out = jax.block_until_ready(fwd_f32(x, params))
    ref = reference_forward(x, params)
    assert out.shape == (B, OUT_F)
    assert jnp.allclose(out, ref, atol=1e-5, rtol=1e-5), "mismatch (B=8, f32)"

    # Odd batch, still a single block (lane dim == full array dim path).
    B2 = 37
    x2 = jax.random.normal(kx2, (B2, IN_F), jnp.float32)
    out2 = jax.block_until_ready(fwd_f32(x2, params))
    ref2 = reference_forward(x2, params)
    assert out2.shape == (B2, OUT_F)
    assert jnp.allclose(out2, ref2, atol=1e-5, rtol=1e-5), "mismatch (B=37, f32)"

    # Larger ragged batch: multi-step grid (>=2 steps for v7x megacore) with a
    # masked tail block. Check the exact f32 path tightly and the default bf16
    # operand path with a relaxed tolerance.
    B3 = 600
    x3 = jax.random.normal(kx3, (B3, IN_F), jnp.float32)
    ref3 = reference_forward(x3, params)

    out3f = jax.block_until_ready(fwd_f32(x3, params))
    assert out3f.shape == (B3, OUT_F)
    assert jnp.allclose(out3f, ref3, atol=1e-5, rtol=1e-5), "mismatch (B=600, f32)"

    out3b = jax.block_until_ready(fwd_bf16(x3, params))
    assert out3b.shape == (B3, OUT_F)
    assert jnp.allclose(out3b, ref3, atol=3e-2, rtol=0.0), "mismatch (B=600, bf16)"

    print("KERNEL_OK")
</pallas_src>

<mosaic_0001>
module attributes {stable_mosaic.version = 11 : i64} {
  func.func @contempt_kernel(%arg0: i32, %arg1: memref<1x2xf32, #tpu.memory_space<smem>>, %arg2: memref<24x8xf32, #tpu.memory_space<vmem>>, %arg3: memref<16x24xf32, #tpu.memory_space<vmem>>, %arg4: memref<16x1xf32, #tpu.memory_space<vmem>>, %arg5: memref<12x16xf32, #tpu.memory_space<vmem>>, %arg6: memref<12x1xf32, #tpu.memory_space<vmem>>, %arg7: memref<7x12xf32, #tpu.memory_space<vmem>>, %arg8: memref<7x1xf32, #tpu.memory_space<vmem>>, %arg9: memref<7x8xf32, #tpu.memory_space<vmem>>) attributes {dimension_semantics = [#tpu.dimension_semantics<parallel>], iteration_bounds = array<i64: 1>, scalar_prefetch = 0 : i64, scratch_operands = 0 : i64, tpu.core_type = #tpu.core_type<tc>, window_params = [{transform_indices = @transform_0, window_bounds = array<i64: 1, 2>}, {transform_indices = @transform_1, window_bounds = array<i64: 24, 8>}, {pipeline_mode = #tpu.pipeline_mode<synchronous>, transform_indices = @transform_2, window_bounds = array<i64: 16, 24>}, {pipeline_mode = #tpu.pipeline_mode<synchronous>, transform_indices = @transform_3, window_bounds = array<i64: 16, 1>}, {pipeline_mode = #tpu.pipeline_mode<synchronous>, transform_indices = @transform_4, window_bounds = array<i64: 12, 16>}, {pipeline_mode = #tpu.pipeline_mode<synchronous>, transform_indices = @transform_5, window_bounds = array<i64: 12, 1>}, {pipeline_mode = #tpu.pipeline_mode<synchronous>, transform_indices = @transform_6, window_bounds = array<i64: 7, 12>}, {pipeline_mode = #tpu.pipeline_mode<synchronous>, transform_indices = @transform_7, window_bounds = array<i64: 7, 1>}, {transform_indices = @transform_8, window_bounds = array<i64: 7, 8>}]} {
    %c0 = arith.constant 0 : index
    %c0_0 = arith.constant 0 : index
    %0 = memref.load %arg1[%c0, %c0_0] : memref<1x2xf32, #tpu.memory_space<smem>>
    %c0_1 = arith.constant 0 : index
    %c1 = arith.constant 1 : index
    %1 = memref.load %arg1[%c0_1, %c1] : memref<1x2xf32, #tpu.memory_space<smem>>
    %c0_2 = arith.constant 0 : index
    %c0_3 = arith.constant 0 : index
    %2 = vector.load %arg3[%c0_2, %c0_3] : memref<16x24xf32, #tpu.memory_space<vmem>>, vector<16x24xf32>
    %c0_4 = arith.constant 0 : index
    %c0_5 = arith.constant 0 : index
    %3 = vector.load %arg2[%c0_4, %c0_5] : memref<24x8xf32, #tpu.memory_space<vmem>>, vector<24x8xf32>
    %cst = arith.constant dense<0.000000e+00> : vector<16x8xf32>
    %4 = tpu.matmul %2, %3, %cst {dimension_numbers = #tpu.dot_dimension_numbers<[1], [0], [0], [1], [0, 0, 1, 1], [], []>} : vector<16x24xf32>, vector<24x8xf32>, vector<16x8xf32> -> vector<16x8xf32>
    %c0_6 = arith.constant 0 : index
    %c0_7 = arith.constant 0 : index
    %5 = vector.load %arg4[%c0_6, %c0_7] : memref<16x1xf32, #tpu.memory_space<vmem>>, vector<16x1xf32>
    %6 = vector.broadcast %5 : vector<16x1xf32> to vector<16x8xf32>
    %7 = arith.addf %4, %6 : vector<16x8xf32>
    %cst_8 = arith.constant 0.000000e+00 : f32
    %8 = vector.broadcast %cst_8 : f32 to vector<16x8xf32>
    %9 = arith.cmpf ogt, %7, %8 : vector<16x8xf32>
    %10 = vector.broadcast %0 : f32 to vector<16x8xf32>
    %11 = arith.mulf %10, %7 : vector<16x8xf32>
    %12 = arith.select %9, %7, %11 : vector<16x8xi1>, vector<16x8xf32>
    %c0_9 = arith.constant 0 : index
    %c0_10 = arith.constant 0 : index
    %13 = vector.load %arg5[%c0_9, %c0_10] : memref<12x16xf32, #tpu.memory_space<vmem>>, vector<12x16xf32>
    %cst_11 = arith.constant dense<0.000000e+00> : vector<12x8xf32>
    %14 = tpu.matmul %13, %12, %cst_11 {dimension_numbers = #tpu.dot_dimension_numbers<[1], [0], [0], [1], [0, 0, 1, 1], [], []>} : vector<12x16xf32>, vector<16x8xf32>, vector<12x8xf32> -> vector<12x8xf32>
    %c0_12 = arith.constant 0 : index
    %c0_13 = arith.constant 0 : index
    %15 = vector.load %arg6[%c0_12, %c0_13] : memref<12x1xf32, #tpu.memory_space<vmem>>, vector<12x1xf32>
    %16 = vector.broadcast %15 : vector<12x1xf32> to vector<12x8xf32>
    %17 = arith.addf %14, %16 : vector<12x8xf32>
    %cst_14 = arith.constant 0.000000e+00 : f32
    %18 = vector.broadcast %cst_14 : f32 to vector<12x8xf32>
    %19 = arith.cmpf ogt, %17, %18 : vector<12x8xf32>
    %20 = vector.broadcast %1 : f32 to vector<12x8xf32>
    %21 = arith.mulf %20, %17 : vector<12x8xf32>
    %22 = arith.select %19, %17, %21 : vector<12x8xi1>, vector<12x8xf32>
    %c0_15 = arith.constant 0 : index
    %c0_16 = arith.constant 0 : index
    %23 = vector.load %arg7[%c0_15, %c0_16] : memref<7x12xf32, #tpu.memory_space<vmem>>, vector<7x12xf32>
    %cst_17 = arith.constant dense<0.000000e+00> : vector<7x8xf32>
    %24 = tpu.matmul %23, %22, %cst_17 {dimension_numbers = #tpu.dot_dimension_numbers<[1], [0], [0], [1], [0, 0, 1, 1], [], []>} : vector<7x12xf32>, vector<12x8xf32>, vector<7x8xf32> -> vector<7x8xf32>
    %c0_18 = arith.constant 0 : index
    %c0_19 = arith.constant 0 : index
    %25 = vector.load %arg8[%c0_18, %c0_19] : memref<7x1xf32, #tpu.memory_space<vmem>>, vector<7x1xf32>
    %26 = vector.broadcast %25 : vector<7x1xf32> to vector<7x8xf32>
    %27 = arith.addf %24, %26 : vector<7x8xf32>
    %28 = arith.negf %27 : vector<7x8xf32>
    %29 = math.exp %28 : vector<7x8xf32>
    %cst_20 = arith.constant 1.000000e+00 : f32
    %30 = vector.broadcast %cst_20 : f32 to vector<7x8xf32>
    %31 = arith.addf %30, %29 : vector<7x8xf32>
    %32 = arith.divf %30, %31 : vector<7x8xf32>
    %c0_21 = arith.constant 0 : index
    %c0_22 = arith.constant 0 : index
    %33 = vector.load %arg9[%c0_21, %c0_22] : memref<7x8xf32, #tpu.memory_space<vmem>>, vector<7x8xf32>
    tpu.vector_store %arg9[%c0_21, %c0_22], %32 {strides = array<i32>} : memref<7x8xf32, #tpu.memory_space<vmem>>, vector<7x8xf32>,
    return
  }
  func.func @transform_0(%arg0: i32) -> (i32, i32) {
    %c0_i32 = arith.constant 0 : i32
    %c0_i32_0 = arith.constant 0 : i32
    %c0_i32_1 = arith.constant 0 : i32
    return %c0_i32, %c0_i32_0 : i32, i32
  }
  func.func @transform_1(%arg0: i32) -> (i32, i32) {
    %c0_i32 = arith.constant 0 : i32
    %c0_i32_0 = arith.constant 0 : i32
    return %c0_i32, %arg0 : i32, i32
  }
  func.func @transform_2(%arg0: i32) -> (i32, i32) {
    %c0_i32 = arith.constant 0 : i32
    %c0_i32_0 = arith.constant 0 : i32
    %c0_i32_1 = arith.constant 0 : i32
    return %c0_i32, %c0_i32_0 : i32, i32
  }
  func.func @transform_3(%arg0: i32) -> (i32, i32) {
    %c0_i32 = arith.constant 0 : i32
    %c0_i32_0 = arith.constant 0 : i32
    %c0_i32_1 = arith.constant 0 : i32
    return %c0_i32, %c0_i32_0 : i32, i32
  }
  func.func @transform_4(%arg0: i32) -> (i32, i32) {
    %c0_i32 = arith.constant 0 : i32
    %c0_i32_0 = arith.constant 0 : i32
    %c0_i32_1 = arith.constant 0 : i32
    return %c0_i32, %c0_i32_0 : i32, i32
  }
  func.func @transform_5(%arg0: i32) -> (i32, i32) {
    %c0_i32 = arith.constant 0 : i32
    %c0_i32_0 = arith.constant 0 : i32
    %c0_i32_1 = arith.constant 0 : i32
    return %c0_i32, %c0_i32_0 : i32, i32
  }
  func.func @transform_6(%arg0: i32) -> (i32, i32) {
    %c0_i32 = arith.constant 0 : i32
    %c0_i32_0 = arith.constant 0 : i32
    %c0_i32_1 = arith.constant 0 : i32
    return %c0_i32, %c0_i32_0 : i32, i32
  }
  func.func @transform_7(%arg0: i32) -> (i32, i32) {
    %c0_i32 = arith.constant 0 : i32
    %c0_i32_0 = arith.constant 0 : i32
    %c0_i32_1 = arith.constant 0 : i32
    return %c0_i32, %c0_i32_0 : i32, i32
  }
  func.func @transform_8(%arg0: i32) -> (i32, i32) {
    %c0_i32 = arith.constant 0 : i32
    %c0_i32_0 = arith.constant 0 : i32
    return %c0_i32, %arg0 : i32, i32
  }
}

</mosaic_0001>

<llo_original>
// kernel: contempt_net_forward.1
$region0: #{contempt_net_forward.1}
  #allocation0 [shape = 'u32[]', space=smem, size = 0x4, offset = 0x4, fixed_abs, tag = 'smem constant byte address 0x4 - core index']
  #allocation1 [shape = 'u32[144,128]{1,0:T(1,128)}', space=vmem, size = 0x12000, scoped, tag = 'internal scratch']
  %s0 = inlined_call_operand.vmem [shape: f32[1,2], index: 0, kind: input, shape index: {}]
  %s1 = inlined_call_operand.vmem [shape: f32[24,8], index: 1, kind: input, shape index: {}]
  %s2 = inlined_call_operand.vmem [shape: f32[16,24], index: 2, kind: input, shape index: {}]
  %s3 = inlined_call_operand.vmem [shape: f32[16,1], index: 3, kind: input, shape index: {}]
  %s4 = inlined_call_operand.vmem [shape: f32[12,16], index: 4, kind: input, shape index: {}]
  %s5 = inlined_call_operand.vmem [shape: f32[12,1], index: 5, kind: input, shape index: {}]
  %s6 = inlined_call_operand.vmem [shape: f32[7,12], index: 6, kind: input, shape index: {}]
  %s7 = inlined_call_operand.vmem [shape: f32[7,1], index: 7, kind: input, shape index: {}]
  %s8 = inlined_call_operand.vmem [shape: f32[7,8], index: 8, kind: output, shape index: {}]
  %s9 = sld [smem:[#allocation0]]
  $region46: #{contempt_net_forward.1} parent=0
    _
  %s11 = ssub.s32 1, %s9
  %s12 = scalar_select 0, %s11, %s9
  $region1: #{contempt_net_forward.1} parent=0
    #allocation2 [shape = 'u8[512]{0}', space=smem, size = 0x200, scoped, tag = 'input window, operand 0, single buffered']
    #allocation3 [shape = 's32[1]{0}', space=sflag, size = 0x4, scoped, tag = 'scoped memory for contempt_net_forward.1']
    %13 = vsyncpa [#allocation3], 0
    // Predicated region
    $region2: #{contempt_net_forward.1} parent=1 // pred_check
      _
    $region3: #{contempt_net_forward.1} parent=1 // pred_check_branch
      %15 = sbr.rel (0) target = $region5
    $region4: #{contempt_net_forward.1} parent=1 // pred_region
      %s17 = ssub.s32 16, 16
      %18 = vsyncadd [#allocation3], %s17
      %s20 = sshll.u32 %s0, 4
      %s21 = int_to_ptr.vmem [resolvable:$true] %s20
      %23 = dma.vmem_to_smem %s21, 16, [#allocation2], [#allocation3]
    $region5: #{contempt_net_forward.1} parent=1 // pred_fallthru
      _
    // Predicated region
    $region6: #{contempt_net_forward.1} parent=1 // pred_check
      _
    $region7: #{contempt_net_forward.1} parent=1 // pred_check_branch
      %25 = sbr.rel (0) target = $region9
    $region8: #{contempt_net_forward.1} parent=1 // pred_region
      _
    $region9: #{contempt_net_forward.1} parent=1 // pred_fallthru
      _
    // Predicated region
    $region10: #{contempt_net_forward.1} parent=1 // pred_check
      _
    $region11: #{contempt_net_forward.1} parent=1 // pred_check_branch
      %27 = sbr.rel (0) target = $region13
    $region12: #{contempt_net_forward.1} parent=1 // pred_region
      _
    $region13: #{contempt_net_forward.1} parent=1 // pred_fallthru
      _
    // Predicated region
    $region14: #{contempt_net_forward.1} parent=1 // pred_check
      _
    $region15: #{contempt_net_forward.1} parent=1 // pred_check_branch
      %29 = sbr.rel (0) target = $region17
    $region16: #{contempt_net_forward.1} parent=1 // pred_region
      _
    $region17: #{contempt_net_forward.1} parent=1 // pred_fallthru
      _
    // Predicated region
    $region18: #{contempt_net_forward.1} parent=1 // pred_check
      _
    $region19: #{contempt_net_forward.1} parent=1 // pred_check_branch
      %31 = sbr.rel (0) target = $region21
    $region20: #{contempt_net_forward.1} parent=1 // pred_region
      _
    $region21: #{contempt_net_forward.1} parent=1 // pred_fallthru
      _
    // Predicated region
    $region22: #{contempt_net_forward.1} parent=1 // pred_check
      _
    $region23: #{contempt_net_forward.1} parent=1 // pred_check_branch
      %33 = sbr.rel (0) target = $region25
    $region24: #{contempt_net_forward.1} parent=1 // pred_region
      _
    $region25: #{contempt_net_forward.1} parent=1 // pred_fallthru
      _
    // Predicated region
    $region26: #{contempt_net_forward.1} parent=1 // pred_check
      _
    $region27: #{contempt_net_forward.1} parent=1 // pred_check_branch
      %35 = sbr.rel (0) target = $region29
    $region28: #{contempt_net_forward.1} parent=1 // pred_region
      _
    $region29: #{contempt_net_forward.1} parent=1 // pred_fallthru
      _
    // Predicated region
    $region30: #{contempt_net_forward.1} parent=1 // pred_check
      _
    $region31: #{contempt_net_forward.1} parent=1 // pred_check_branch
      %37 = sbr.rel (0) target = $region33
    $region32: #{contempt_net_forward.1} parent=1 // pred_region
      _
    $region33: #{contempt_net_forward.1} parent=1 // pred_fallthru
      _
    // Predicated region
    $region34: #{contempt_net_forward.1} parent=1 // pred_check
      _
    $region35: #{contempt_net_forward.1} parent=1 // pred_check_branch
      %39 = sbr.rel (0) target = $region37
    $region36: #{contempt_net_forward.1} parent=1 // pred_region
      %40 = dma.done [#allocation3], 16
    $region37: #{contempt_net_forward.1} parent=1 // pred_fallthru
      _
    %41 = sfence
    %s42 = sld [smem:[#allocation2]]
    %s43 = sld [smem:[#allocation2 + $0x1]]
    %v44 = vld [vmem:[%s2] sm:$0xff]
    %v45 = vld [vmem:[%s2 + $0x8] sm:$0xff]
    %v46 = vld [vmem:[%s1] sm:$0xff]
    %v47 = vld [vmem:[%s1 + $0x8] sm:$0xff]
    %v48 = vld [vmem:[%s1 + $0x10] sm:$0xff]
    %v49 = vld [vmem:[%s3] sm:$0xff]
    %v50 = vld [vmem:[%s3 + $0x8] sm:$0xff]
    %52 = vset.pattern.permute.xlu0 0
    %53 = vperm.xlu0 %52, %v49
    %v54 = vpop.permute.xlu0 %53
    %57 = vset.pattern.permute.xlu0 0
    %58 = vperm.xlu0 %57, %v50
    %v59 = vpop.permute.xlu0 %58
    %vm61 = vcmask 195584
    %v63 = vsel %vm61, %v44, 0
    %v66 = vsel %vm61, %v45, 0
    %68 = vmatprep.subr.mxu0 0.0
    %69 = vmatpush1.msra.mxu0 %v46
    %70 = vmatprep.subr.mxu0 0.0
    %71 = vmatpush1.msra.mxu0 %v47
    %72 = vmatprep.subr.mxu0 0.0
    %73 = vmatpush1.msra.mxu0 %v48
    %74 = vmatprep.subr.mxu0 0.0
    %75 = vmatpush1.msra.mxu0 0.0
    %76 = vmatprep.subr.mxu0 0.0
    %77 = vmatpush1.msra.mxu0 0.0
    %78 = vmatprep.subr.mxu0 0.0
    %79 = vmatpush1.msra.mxu0 0.0
    %80 = vmatprep.subr.mxu0 0.0
    %81 = vmatpush1.msra.mxu0 0.0
    %82 = vmatprep.subr.mxu0 0.0
    %83 = vmatpush1.msra.mxu0 0.0
    %84 = vmatprep.subr.mxu0 0.0
    %85 = vmatpush1.msra.mxu0 0.0
    %86 = vmatprep.subr.mxu0 0.0
    %87 = vmatpush1.msra.mxu0 0.0
    %88 = vmatprep.subr.mxu0 0.0
    %89 = vmatpush1.msra.mxu0 0.0
    %90 = vmatprep.subr.mxu0 0.0
    %91 = vmatpush1.msra.mxu0 0.0
    %92 = vmatprep.subr.mxu0 0.0
    %93 = vmatpush1.msra.mxu0 0.0
    %94 = vmatprep.subr.mxu0 0.0
    %95 = vmatpush1.msra.mxu0 0.0
    %96 = vmatprep.subr.mxu0 0.0
    %97 = vmatpush1.msra.mxu0 0.0
    %98 = vmatprep.subr.mxu0 0.0
    %99 = vmatpush1.msra.mxu0 0.0
    %100 = vmatprep.subr.mxu0 0.0
    %101 = vmatpush1.msra.mxu0 0.0
    %102 = vmatprep.subr.mxu0 0.0
    %103 = vmatpush1.msra.mxu0 0.0
    %104 = vmatprep.subr.mxu0 0.0
    %105 = vmatpush1.msra.mxu0 0.0
    %106 = vmatprep.subr.mxu0 0.0
    %107 = vmatpush1.msra.mxu0 0.0
    %108 = vmatprep.subr.mxu0 0.0
    %109 = vmatpush1.msra.mxu0 0.0
    %110 = vmatprep.subr.mxu0 0.0
    %111 = vmatpush1.msra.mxu0 0.0
    %112 = vmatprep.subr.mxu0 0.0
    %113 = vmatpush1.msra.mxu0 0.0
    %114 = vmatprep.subr.mxu0 0.0
    %115 = vmatpush1.msra.mxu0 0.0
    %116 = vmatprep.subr.mxu0 0.0
    %117 = vmatpush1.msra.mxu0 0.0
    %118 = vmatprep.subr.mxu0 0.0
    %119 = vmatpush1.msra.mxu0 0.0
    %120 = vmatprep.subr.mxu0 0.0
    %121 = vmatpush1.msra.mxu0 0.0
    %122 = vmatprep.subr.mxu0 0.0
    %123 = vmatpush1.msra.mxu0 0.0
    %124 = vmatprep.subr.mxu0 0.0
    %125 = vmatpush1.msra.mxu0 0.0
    %126 = vmatprep.subr.mxu0 0.0
    %127 = vmatpush1.msra.mxu0 0.0
    %128 = vmatprep.subr.mxu0 0.0
    %129 = vmatpush1.msra.mxu0 0.0
    %130 = vmatprep.subr.mxu0 0.0
    %131 = vmatpush1.msra.mxu0 0.0
    %132 = vmatprep.mubr.f32.mxu0 0.0
    %133 = vmatmul.mubr.f32.gmra.mrb[0].mxu0 %v63
    %v134 = vpop.f32.mrb[0].mxu0
    %v135 = vadd.f32 %v54, %v134
    %v136 = vpop.f32.mrb[0].mxu0
    %137 = vmatprep.mubr.f32.mxu0 0.0
    %138 = vmatmul.mubr.f32.gmra.mrb[0].mxu0 %v66
    %v139 = vpop.f32.mrb[0].mxu0
    %v140 = vadd.f32 %v59, %v139
    %v141 = vpop.f32.mrb[0].mxu0
    %142 = vdwg.mxu0
    %vm143 = vcmp.gt.f32.partialorder %v135, 0.0
    %vm144 = vcmp.gt.f32.partialorder %v140, 0.0
    %v145 = vstv %s42
    %v146 = vmul.f32 %v145, %v135
    %v147 = vmul.f32 %v145, %v140
    %v148 = vsel %vm143, %v135, %v146
    %v149 = vsel %vm144, %v140, %v147
    %v150 = vld [vmem:[%s4] sm:$0xff]
    %v151 = vld [vmem:[%s4 + $0x8] sm:$0xf]
    %v152 = vld [vmem:[%s5] sm:$0xff]
    %v153 = vld [vmem:[%s5 + $0x8] sm:$0xf]
    %155 = vset.pattern.permute.xlu0 0
    %156 = vperm.xlu0 %155, %v152
    %v157 = vpop.permute.xlu0 %156
    %160 = vset.pattern.permute.xlu0 0
    %161 = vperm.xlu0 %160, %v153
    %v162 = vpop.permute.xlu0 %161
    %vm164 = vcmask 130048
    %v166 = vsel %vm164, %v150, 0
    %v169 = vsel %vm164, %v151, 0
    %171 = vmatprep.subr.mxu0 0.0
    %172 = vmatpush1.msra.mxu0 %v148
    %173 = vmatprep.subr.mxu0 0.0
    %174 = vmatpush1.msra.mxu0 %v149
    %175 = vmatprep.subr.mxu0 0.0
    %176 = vmatpush1.msra.mxu0 0.0
    %177 = vmatprep.subr.mxu0 0.0
    %178 = vmatpush1.msra.mxu0 0.0
    %179 = vmatprep.subr.mxu0 0.0
    %180 = vmatpush1.msra.mxu0 0.0
    %181 = vmatprep.subr.mxu0 0.0
    %182 = vmatpush1.msra.mxu0 0.0
    %183 = vmatprep.subr.mxu0 0.0
    %184 = vmatpush1.msra.mxu0 0.0
    %185 = vmatprep.subr.mxu0 0.0
    %186 = vmatpush1.msra.mxu0 0.0
    %187 = vmatprep.subr.mxu0 0.0
    %188 = vmatpush1.msra.mxu0 0.0
    %189 = vmatprep.subr.mxu0 0.0
    %190 = vmatpush1.msra.mxu0 0.0
    %191 = vmatprep.subr.mxu0 0.0
    %192 = vmatpush1.msra.mxu0 0.0
    %193 = vmatprep.subr.mxu0 0.0
    %194 = vmatpush1.msra.mxu0 0.0
    %195 = vmatprep.subr.mxu0 0.0
    %196 = vmatpush1.msra.mxu0 0.0
    %197 = vmatprep.subr.mxu0 0.0
    %198 = vmatpush1.msra.mxu0 0.0
    %199 = vmatprep.subr.mxu0 0.0
    %200 = vmatpush1.msra.mxu0 0.0
    %201 = vmatprep.subr.mxu0 0.0
    %202 = vmatpush1.msra.mxu0 0.0
    %203 = vmatprep.subr.mxu0 0.0
    %204 = vmatpush1.msra.mxu0 0.0
    %205 = vmatprep.subr.mxu0 0.0
    %206 = vmatpush1.msra.mxu0 0.0
    %207 = vmatprep.subr.mxu0 0.0
    %208 = vmatpush1.msra.mxu0 0.0
    %209 = vmatprep.subr.mxu0 0.0
    %210 = vmatpush1.msra.mxu0 0.0
    %211 = vmatprep.subr.mxu0 0.0
    %212 = vmatpush1.msra.mxu0 0.0
    %213 = vmatprep.subr.mxu0 0.0
    %214 = vmatpush1.msra.mxu0 0.0
    %215 = vmatprep.subr.mxu0 0.0
    %216 = vmatpush1.msra.mxu0 0.0
    %217 = vmatprep.subr.mxu0 0.0
    %218 = vmatpush1.msra.mxu0 0.0
    %219 = vmatprep.subr.mxu0 0.0
    %220 = vmatpush1.msra.mxu0 0.0
    %221 = vmatprep.subr.mxu0 0.0
    %222 = vmatpush1.msra.mxu0 0.0
    %223 = vmatprep.subr.mxu0 0.0
    %224 = vmatpush1.msra.mxu0 0.0
    %225 = vmatprep.subr.mxu0 0.0
    %226 = vmatpush1.msra.mxu0 0.0
    %227 = vmatprep.subr.mxu0 0.0
    %228 = vmatpush1.msra.mxu0 0.0
    %229 = vmatprep.subr.mxu0 0.0
    %230 = vmatpush1.msra.mxu0 0.0
    %231 = vmatprep.subr.mxu0 0.0
    %232 = vmatpush1.msra.mxu0 0.0
    %233 = vmatprep.subr.mxu0 0.0
    %234 = vmatpush1.msra.mxu0 0.0
    %235 = vmatprep.mubr.f32.mxu0 0.0
    %236 = vmatmul.mubr.f32.gmra.mrb[0].mxu0 %v166
    %v237 = vpop.f32.mrb[0].mxu0
    %v238 = vadd.f32 %v157, %v237
    %v239 = vpop.f32.mrb[0].mxu0
    %240 = vmatprep.mubr.f32.mxu0 0.0
    %241 = vmatmul.mubr.f32.gmra.mrb[0].mxu0 %v169
    %v242 = vpop.f32.mrb[0].mxu0
    %v243 = vadd.f32 %v162, %v242
    %v244 = vpop.f32.mrb[0].mxu0
    %245 = vdwg.mxu0
    %vm246 = vcmp.gt.f32.partialorder %v238, 0.0
    %vm247 = vcmp.gt.f32.partialorder %v243, 0.0
    %v248 = vstv %s43
    %v249 = vmul.f32 %v248, %v238
    %v250 = vmul.f32 %v248, %v243
    %v251 = vsel %vm246, %v238, %v249
    %v252 = vsel %vm247, %v243, %v250
    %v253 = vld [vmem:[%s6] sm:$0x7f]
    %v254 = vld [vmem:[%s7] sm:$0x7f]
    %256 = vset.pattern.permute.xlu0 0
    %257 = vperm.xlu0 %256, %v254
    %v258 = vpop.permute.xlu0 %257
    %vm260 = vcmask 97280
    %v262 = vsel %vm260, %v253, 0
    %vm264 = vcmask 1043456
    %v266 = vsel %vm264, %v252, 0
    %268 = vmatprep.subr.mxu0 0.0
    %269 = vmatpush1.msra.mxu0 %v251
    %270 = vmatprep.subr.mxu0 0.0
    %271 = vmatpush1.msra.mxu0 %v266
    %272 = vmatprep.subr.mxu0 0.0
    %273 = vmatpush1.msra.mxu0 0.0
    %274 = vmatprep.subr.mxu0 0.0
    %275 = vmatpush1.msra.mxu0 0.0
    %276 = vmatprep.subr.mxu0 0.0
    %277 = vmatpush1.msra.mxu0 0.0
    %278 = vmatprep.subr.mxu0 0.0
    %279 = vmatpush1.msra.mxu0 0.0
    %280 = vmatprep.subr.mxu0 0.0
    %281 = vmatpush1.msra.mxu0 0.0
    %282 = vmatprep.subr.mxu0 0.0
    %283 = vmatpush1.msra.mxu0 0.0
    %284 = vmatprep.subr.mxu0 0.0
    %285 = vmatpush1.msra.mxu0 0.0
    %286 = vmatprep.subr.mxu0 0.0
    %287 = vmatpush1.msra.mxu0 0.0
    %288 = vmatprep.subr.mxu0 0.0
    %289 = vmatpush1.msra.mxu0 0.0
    %290 = vmatprep.subr.mxu0 0.0
    %291 = vmatpush1.msra.mxu0 0.0
    %292 = vmatprep.subr.mxu0 0.0
    %293 = vmatpush1.msra.mxu0 0.0
    %294 = vmatprep.subr.mxu0 0.0
    %295 = vmatpush1.msra.mxu0 0.0
    %296 = vmatprep.subr.mxu0 0.0
    %297 = vmatpush1.msra.mxu0 0.0
    %298 = vmatprep.subr.mxu0 0.0
    %299 = vmatpush1.msra.mxu0 0.0
    %300 = vmatprep.subr.mxu0 0.0
    %301 = vmatpush1.msra.mxu0 0.0
    %302 = vmatprep.subr.mxu0 0.0
    %303 = vmatpush1.msra.mxu0 0.0
    %304 = vmatprep.subr.mxu0 0.0
    %305 = vmatpush1.msra.mxu0 0.0
    %306 = vmatprep.subr.mxu0 0.0
    %307 = vmatpush1.msra.mxu0 0.0
    %308 = vmatprep.subr.mxu0 0.0
    %309 = vmatpush1.msra.mxu0 0.0
    %310 = vmatprep.subr.mxu0 0.0
    %311 = vmatpush1.msra.mxu0 0.0
    %312 = vmatprep.subr.mxu0 0.0
    %313 = vmatpush1.msra.mxu0 0.0
    %314 = vmatprep.subr.mxu0 0.0
    %315 = vmatpush1.msra.mxu0 0.0
    %316 = vmatprep.subr.mxu0 0.0
    %317 = vmatpush1.msra.mxu0 0.0
    %318 = vmatprep.subr.mxu0 0.0
    %319 = vmatpush1.msra.mxu0 0.0
    %320 = vmatprep.subr.mxu0 0.0
    %321 = vmatpush1.msra.mxu0 0.0
    %322 = vmatprep.subr.mxu0 0.0
    %323 = vmatpush1.msra.mxu0 0.0
    %324 = vmatprep.subr.mxu0 0.0
    %325 = vmatpush1.msra.mxu0 0.0
    %326 = vmatprep.subr.mxu0 0.0
    %327 = vmatpush1.msra.mxu0 0.0
    %328 = vmatprep.subr.mxu0 0.0
    %329 = vmatpush1.msra.mxu0 0.0
    %330 = vmatprep.subr.mxu0 0.0
    %331 = vmatpush1.msra.mxu0 0.0
    %332 = vmatprep.mubr.f32.mxu0 0.0
    %333 = vmatmul.mubr.f32.gmra.mrb[0].mxu0 %v262
    %v334 = vpop.f32.mrb[0].mxu0
    %v335 = vadd.f32 %v258, %v334
    %v336 = vpop.f32.mrb[0].mxu0
    %337 = vdwg.mxu0
    %v338 = vxor.u32 %v335, 2147483648
    %v339 = vmul.f32 %v338, 1.442695
    %v340 = vpow.pop %v339
    %v341 = vadd.f32 %v340, 1.0
    %v342 = vrcp.pop %v341
    %v343 = vmul.f32 1.0, %v342
    %vm344 = vcmask 63488
    %345 = vst.msk [vmem:[%s8] sm:$0x7f] %vm344, %v343
    // Predicated region
    $region38: #{contempt_net_forward.1} parent=1 // pred_check
      _
    $region39: #{contempt_net_forward.1} parent=1 // pred_check_branch
      %347 = sbr.rel (0) target = $region41
    $region40: #{contempt_net_forward.1} parent=1 // pred_region
      _
    $region41: #{contempt_net_forward.1} parent=1 // pred_fallthru
      _
    // Predicated region
    $region42: #{contempt_net_forward.1} parent=1 // pred_check
      _
    $region43: #{contempt_net_forward.1} parent=1 // pred_check_branch
      %349 = sbr.rel (0) target = $region45
    $region44: #{contempt_net_forward.1} parent=1 // pred_region
      _
    $region45: #{contempt_net_forward.1} parent=1 // pred_fallthru
      _
    %350 = vsyncpa [#allocation3], 1

</llo_original>
